<compile_context>
chip_gen: v5e
topology: v5e:2x2
jax: 0.10.0
libtpu: 0.0.40
codegen_flags: <defaults>
</compile_context>

<pallas_src>
import jax
import jax.numpy as jnp
from jax.experimental import pallas as pl
from jax.experimental.pallas import tpu as pltpu

LANE = 128
_TILE_TARGET_BYTES_DEFAULT = 4 << 20  # ~4 MiB tiles (v6e / v7x)
_TILE_TARGET_BYTES_V5E = 2 << 20      # ~2 MiB tiles (v5e: 16 MiB scoped VMEM)


def _copy_kernel(x_ref, o_ref):
    # Identity copy of the current (tr, cols) tile.
    o_ref[...] = x_ref[...]


def _resolve_unsqueeze_dim(ndim: int, dim: int) -> int:
    """Replicate torch.unsqueeze dim handling: dim in [-(ndim+1), ndim]."""
    if not -(ndim + 1) <= dim <= ndim:
        raise ValueError(
            f"Dimension out of range (expected to be in range of "
            f"[{-(ndim + 1)}, {ndim}], but got {dim})"
        )
    if dim < 0:
        dim += ndim + 1
    return dim


def _device_kind() -> str:
    try:
        return jax.devices()[0].device_kind.lower()
    except Exception:
        return ""


def _tile_target_bytes() -> int:
    kind = _device_kind()
    if "v5e" in kind or "v5 lite" in kind or "v5litepod" in kind:
        return _TILE_TARGET_BYTES_V5E
    return _TILE_TARGET_BYTES_DEFAULT


def _row_axis_semantics(num_steps: int):
    # "parallel" is codegen-neutral on single-TC chips; CORE_PARALLEL actually
    # shards the row-tile axis across v7x's 2 TensorCores so both drive DMA.
    if num_steps > 1 and "v7" in _device_kind():
        return (pltpu.CORE_PARALLEL,)
    return ("parallel",)


def _pallas_identity_copy(x, *, donate: bool = False):
    """Single-pass streaming identity copy of x; returns a (rows, cols) slab."""
    total = x.size
    # Zero-cost row-major 2-D view.  Lane-dense (cols=128) when possible so
    # stores are unmasked; otherwise use the full trailing dim and let the
    # kernel handle the ragged lanes — never a separate pad/slice XLA pass.
    if total % LANE == 0:
        cols = LANE
    else:
        cols = x.shape[-1] if x.ndim >= 1 else 1
    rows = total // cols
    x2d = x.reshape(rows, cols)

    itemsize = jnp.dtype(x2d.dtype).itemsize
    target = _tile_target_bytes()
    tr = target // max(1, cols * itemsize)
    tr = max(8, (tr // 32) * 32)  # multiple of 32 rows: full sublane packing
    if tr >= rows:
        tr = rows                  # single full-extent block (any row count ok)
    num_steps = pl.cdiv(rows, tr)

    tile_bytes = tr * cols * itemsize
    # 2 arrays x 2 pipeline buffers per tile, plus slack; never exceed the
    # smallest physical VMEM we target (64 MiB on v7x; 32 MiB scoped is ample).
    vmem_limit = min(max(4 * tile_bytes + (4 << 20), 16 << 20), 32 << 20)

    return pl.pallas_call(
        _copy_kernel,
        out_shape=jax.ShapeDtypeStruct((rows, cols), x2d.dtype),
        grid_spec=pltpu.PrefetchScalarGridSpec(
            num_scalar_prefetch=0,
            grid=(num_steps,),
            in_specs=[pl.BlockSpec((tr, cols), lambda i: (i, 0))],
            out_specs=pl.BlockSpec((tr, cols), lambda i: (i, 0)),
        ),
        compiler_params=pltpu.CompilerParams(
            dimension_semantics=_row_axis_semantics(num_steps),
            vmem_limit_bytes=int(vmem_limit),
        ),
        cost_estimate=pl.CostEstimate(
            flops=0,
            transcendentals=0,
            bytes_accessed=2 * rows * cols * itemsize,
        ),
        # With donate=True the caller must treat the input as consumed
        # (donate it at the jit boundary); lowering becomes in-place.
        input_output_aliases={0: 0} if donate else {},
    )(x2d)


def pallas_unsqueeze(x, dim: int, *, force_pallas_copy: bool = False,
                     donate: bool = False):
    """Equivalent of Unsqueeze(dim)(x) — forward pass only.

    Default path is metadata-only (the optimal lowering: zero bytes moved).
    Set force_pallas_copy=True to route the bytes through the explicit
    single-pass Pallas streaming-copy kernel.
    """
    d = _resolve_unsqueeze_dim(x.ndim, dim)
    out_shape = x.shape[:d] + (1,) + x.shape[d:]

    if not force_pallas_copy or x.size == 0:
        # Metadata-only: inserting a size-1 axis never touches the data.
        return jax.lax.expand_dims(x, (d,))

    y2d = _pallas_identity_copy(x, donate=donate)
    # Target shape is metadata-only (row-major order preserved, as in torch).
    return y2d.reshape(out_shape)


if __name__ == "__main__":
    key = jax.random.PRNGKey(0)
    # Small NCHW-style input consistent with the training pipeline.
    x = jax.random.normal(key, (2, 4, 16, 16), dtype=jnp.float32)
    dim = 1  # Unsqueeze(dim=1): (2, 4, 16, 16) -> (2, 1, 4, 16, 16)

    # Recommended path: metadata-only, zero HBM traffic.
    y_meta = jax.block_until_ready(pallas_unsqueeze(x, dim))

    # Explicit Pallas data path (optimized single-pass streaming copy).
    y_copy = jax.block_until_ready(pallas_unsqueeze(x, dim, force_pallas_copy=True))

    y_ref = jnp.expand_dims(x, dim)
    assert y_meta.shape == (2, 1, 4, 16, 16), y_meta.shape
    assert y_copy.shape == (2, 1, 4, 16, 16), y_copy.shape
    assert y_copy.dtype == x.dtype
    assert bool(jnp.array_equal(y_meta, y_ref))
    assert bool(jnp.array_equal(y_copy, y_ref))

    # Non-128-aligned element count: ragged lanes handled inside the kernel
    # (single pass, no pad/slice XLA traffic).
    x2 = jax.random.normal(jax.random.PRNGKey(0), (3, 5, 7), dtype=jnp.float32)
    y2 = jax.block_until_ready(pallas_unsqueeze(x2, -1, force_pallas_copy=True))
    assert y2.shape == (3, 5, 7, 1), y2.shape
    assert bool(jnp.array_equal(y2, jnp.expand_dims(x2, -1)))

    print("KERNEL_OK")
</pallas_src>

<mosaic_0001>
module attributes {stable_mosaic.version = 11 : i64} {
  func.func @_copy_kernel(%arg0: i32, %arg1: memref<16x128xf32, #tpu.memory_space<vmem>>, %arg2: memref<16x128xf32, #tpu.memory_space<vmem>>) attributes {dimension_semantics = [#tpu.dimension_semantics<parallel>], iteration_bounds = array<i64: 1>, scalar_prefetch = 0 : i64, scratch_operands = 0 : i64, tpu.core_type = #tpu.core_type<tc>, window_params = [{transform_indices = @transform_0, window_bounds = array<i64: 16, 128>}, {transform_indices = @transform_1, window_bounds = array<i64: 16, 128>}]} {
    %c0 = arith.constant 0 : index
    %c0_0 = arith.constant 0 : index
    %0 = vector.load %arg1[%c0, %c0_0] : memref<16x128xf32, #tpu.memory_space<vmem>>, vector<16x128xf32>
    %c0_1 = arith.constant 0 : index
    %c0_2 = arith.constant 0 : index
    %1 = vector.load %arg2[%c0_1, %c0_2] : memref<16x128xf32, #tpu.memory_space<vmem>>, vector<16x128xf32>
    tpu.vector_store %arg2[%c0_1, %c0_2], %0 {strides = array<i32>} : memref<16x128xf32, #tpu.memory_space<vmem>>, vector<16x128xf32>,
    return
  }
  func.func @transform_0(%arg0: i32) -> (i32, i32) {
    %c0_i32 = arith.constant 0 : i32
    %c0_i32_0 = arith.constant 0 : i32
    return %arg0, %c0_i32 : i32, i32
  }
  func.func @transform_1(%arg0: i32) -> (i32, i32) {
    %c0_i32 = arith.constant 0 : i32
    %c0_i32_0 = arith.constant 0 : i32
    return %arg0, %c0_i32 : i32, i32
  }
}

</mosaic_0001>

<llo_original>
// kernel: tpu_custom_call.1
$region0: #{tpu_custom_call.1}
  #allocation0 [shape = 'u32[]', space=smem, size = 0x4, offset = 0x4, fixed_abs, tag = 'smem constant byte address 0x4 - core index']
  #allocation1 [shape = 'u32[72,128]{1,0:T(1,128)}', space=vmem, size = 0x9000, scoped, tag = 'internal scratch']
  %s0 = inlined_call_operand.hbm [shape: f32[16,128], index: 0, kind: input, shape index: {}]
  %s1 = inlined_call_operand.hbm [shape: f32[16,128], index: 1, kind: output, shape index: {}]
  %s2 = sld [smem:[#allocation0]]
  $region18: #{tpu_custom_call.1} parent=0
    _
  %s4 = ssub.s32 1, %s2
  %s5 = scalar_select 0, %s4, %s2
  $region1: #{tpu_custom_call.1} parent=0
    #allocation2 [shape = 'u8[8192]{0}', space=vmem, size = 0x2000, scoped, tag = 'input window, operand 0, single buffered']
    #allocation3 [shape = 's32[1]{0}', space=sflag, size = 0x4, scoped, tag = 'scoped memory for tpu_custom_call.1']
    #allocation4 [shape = 's32[1]{0}', space=sflag, size = 0x4, scoped, tag = 'scoped memory for tpu_custom_call.1']
    #allocation5 [shape = 'u8[8192]{0}', space=vmem, size = 0x2000, scoped, tag = 'output window, operand 0, single buffered']
    %6 = vsyncpa [#allocation3], 0
    %7 = vsyncpa [#allocation4], 0
    // Predicated region
    $region2: #{tpu_custom_call.1} parent=1 // pred_check
      _
    $region3: #{tpu_custom_call.1} parent=1 // pred_check_branch
      %9 = sbr.rel (0) target = $region5
    $region4: #{tpu_custom_call.1} parent=1 // pred_region
      %11 = vsyncadd [#allocation3], 0
      %s12 = sshll.u32 %s0, 4
      %s13 = int_to_ptr.hbm [resolvable:$true] %s12
      %s14 = sshll.u32 [#allocation2], 4
      %s15 = int_to_ptr.vmem [resolvable:$true] %s14
      %20 = dma.hbm_to_vmem [thread:$0]  %s13, 256, %s15, [#allocation3], 128, 128, 8
    $region5: #{tpu_custom_call.1} parent=1 // pred_fallthru
      _
    // Predicated region
    $region6: #{tpu_custom_call.1} parent=1 // pred_check
      _
    $region7: #{tpu_custom_call.1} parent=1 // pred_check_branch
      %22 = sbr.rel (0) target = $region9
    $region8: #{tpu_custom_call.1} parent=1 // pred_region
      %24 = dma.done [#allocation3], 256
    $region9: #{tpu_custom_call.1} parent=1 // pred_fallthru
      _
    %v25 = vld [vmem:[#allocation2] sm:$0xff]
    %v26 = vld [vmem:[#allocation2 + $0x8] sm:$0xff]
    %27 = vst [vmem:[#allocation5] sm:$0xff] %v25
    %28 = vst [vmem:[#allocation5 + $0x8] sm:$0xff] %v26
    // Predicated region
    $region10: #{tpu_custom_call.1} parent=1 // pred_check
      _
    $region11: #{tpu_custom_call.1} parent=1 // pred_check_branch
      %30 = sbr.rel (0) target = $region13
    $region12: #{tpu_custom_call.1} parent=1 // pred_region
      %32 = vsyncadd [#allocation4], 0
      %s33 = sshll.u32 [#allocation5], 4
      %s34 = int_to_ptr.vmem [resolvable:$true] %s33
      %s35 = sshll.u32 %s1, 4
      %s36 = int_to_ptr.hbm [resolvable:$true] %s35
      %41 = dma.vmem_to_hbm [thread:$0]  %s34, 256, %s36, [#allocation4], 128, 128, 8
    $region13: #{tpu_custom_call.1} parent=1 // pred_fallthru
      _
    // Predicated region
    $region14: #{tpu_custom_call.1} parent=1 // pred_check
      _
    $region15: #{tpu_custom_call.1} parent=1 // pred_check_branch
      %43 = sbr.rel (0) target = $region17
    $region16: #{tpu_custom_call.1} parent=1 // pred_region
      %45 = dma.done [#allocation4], 256
    $region17: #{tpu_custom_call.1} parent=1 // pred_fallthru
      _
    %46 = vsyncpa [#allocation3], 1
    %47 = vsyncpa [#allocation4], 1

</llo_original>
